<compile_context>
chip_gen: v5e
topology: v5e:2x2
jax: 0.10.0
libtpu: 0.0.40
codegen_flags: <defaults>
</compile_context>

<pallas_src>
import functools

import jax
import jax.numpy as jnp
from jax import lax
from jax.experimental import pallas as pl
from jax.experimental.pallas import tpu as pltpu


# ---------------------------------------------------------------------------
# Kernels
# ---------------------------------------------------------------------------
def _linear_single_block_kernel(x_ref, w_ref, b_ref, o_ref, *, compute_dtype):
    """Whole problem in one VMEM block (small / unaligned shapes)."""
    x = x_ref[...]                     # (B, D_in)
    w = w_ref[...]                     # (D_out, D_in) -- PyTorch layout, no transpose
    if compute_dtype is not None:
        x = x.astype(compute_dtype)
        w = w.astype(compute_dtype)
    acc = lax.dot_general(
        x, w,
        dimension_numbers=(((1,), (1,)), ((), ())),   # contract D_in with D_in
        preferred_element_type=jnp.float32)           # f32 accumulate on the MXU
    o_ref[...] = (acc + b_ref[...]).astype(o_ref.dtype)


def _linear_tiled_kernel(x_ref, w_ref, b_ref, o_ref, acc_ref, *, compute_dtype):
    """Tiled (M//tm, N//tn, K//tk) grid with K-reduction VMEM accumulator."""
    k = pl.program_id(2)

    @pl.when(k == 0)
    def _():
        acc_ref[...] = jnp.zeros_like(acc_ref)

    x_blk = x_ref[...]                 # (tm, tk)
    w_blk = w_ref[...]                 # (tn, tk)  (transpose folded into index_map)
    if compute_dtype is not None:
        x_blk = x_blk.astype(compute_dtype)
        w_blk = w_blk.astype(compute_dtype)
    acc_ref[...] += lax.dot_general(
        x_blk, w_blk,
        dimension_numbers=(((1,), (1,)), ((), ())),
        preferred_element_type=jnp.float32)

    @pl.when(k == pl.num_programs(2) - 1)
    def _():
        # Bias added once per (i, j) output tile, in f32; cast only at the store.
        o_ref[...] = (acc_ref[...] + b_ref[...]).astype(o_ref.dtype)


# ---------------------------------------------------------------------------
# Tile selection (MXU-aligned, v7x-safe VMEM budget)
# ---------------------------------------------------------------------------
def _pick_tile(dim, candidates):
    for c in candidates:
        if dim >= c and dim % c == 0:
            return c
    return None


def _pick_tiles(m, n, k):
    # MXU-aligned tiles sized so 2*(tm*tk + tk*tn + tm*tn)*4B + acc stays well
    # under the ~32 MiB scoped-VMEM default (safe on v7x's 64 MiB as well).
    tm = _pick_tile(m, (512, 256, 128))
    tn = _pick_tile(n, (512, 256, 128))
    tk = _pick_tile(k, (1024, 512, 256, 128))
    return tm, tn, tk


# ---------------------------------------------------------------------------
# Wrapper (equivalent of torch.nn.Linear forward)
# ---------------------------------------------------------------------------
def linear_pallas(x, weight, bias, *, compute_dtype=None):
    """y = x @ weight.T + bias, with weight in PyTorch (D_out, D_in) layout.

    Args:
      x:      (B, D_in)
      weight: (D_out, D_in)
      bias:   (D_out,)
      compute_dtype: optional dtype (e.g. jnp.bfloat16 on v6e/v7x) for the
        matmul inputs; accumulation stays float32.
    """
    B, d_in = x.shape
    d_out, d_in_w = weight.shape
    assert d_in == d_in_w, "weight/input dim mismatch"
    assert bias.shape == (d_out,)
    b2d = bias.reshape(1, d_out)       # 2-D for TPU-friendly broadcast (metadata only)

    tm, tn, tk = _pick_tiles(B, d_out, d_in)
    if tm is not None and tn is not None and tk is not None:
        # --- MXU-aligned tiled path: pipelined, megacore-parallel on M/N ---
        kernel = functools.partial(_linear_tiled_kernel,
                                   compute_dtype=compute_dtype)
        grid = (B // tm, d_out // tn, d_in // tk)
        elt = jnp.dtype(x.dtype).itemsize
        cost = pl.CostEstimate(
            flops=2 * B * d_out * d_in,
            transcendentals=0,
            bytes_accessed=elt * (B * d_in + d_out * d_in + B * d_out + d_out))
        return pl.pallas_call(
            kernel,
            out_shape=jax.ShapeDtypeStruct((B, d_out), x.dtype),
            grid_spec=pltpu.PrefetchScalarGridSpec(
                num_scalar_prefetch=0,
                grid=grid,
                in_specs=[
                    pl.BlockSpec((tm, tk), lambda i, j, k: (i, k)),   # x tile
                    pl.BlockSpec((tn, tk), lambda i, j, k: (j, k)),   # W tile (no transpose)
                    pl.BlockSpec((1, tn), lambda i, j, k: (0, j)),    # bias tile
                ],
                out_specs=pl.BlockSpec((tm, tn), lambda i, j, k: (i, j)),
                scratch_shapes=[pltpu.VMEM((tm, tn), jnp.float32)]),
            compiler_params=pltpu.CompilerParams(
                dimension_semantics=("parallel", "parallel", "arbitrary")),
            cost_estimate=cost,
        )(x, weight, b2d)

    # --- Small / unaligned path: one gridless invocation, whole arrays in VMEM.
    # At 8x8x8 this is pure launch overhead; fuse into a bigger kernel to win.
    kernel = functools.partial(_linear_single_block_kernel,
                               compute_dtype=compute_dtype)
    return pl.pallas_call(
        kernel,
        out_shape=jax.ShapeDtypeStruct((B, d_out), x.dtype),
        in_specs=[
            pl.BlockSpec(memory_space=pltpu.MemorySpace.VMEM),
            pl.BlockSpec(memory_space=pltpu.MemorySpace.VMEM),
            pl.BlockSpec(memory_space=pltpu.MemorySpace.VMEM),
        ],
        out_specs=pl.BlockSpec(memory_space=pltpu.MemorySpace.VMEM),
    )(x, weight, b2d)


if __name__ == "__main__":
    # Shapes implied by SimpleModel(input_dim=8, output_dim=8).
    input_dim = 8
    output_dim = 8
    batch = 8

    key = jax.random.PRNGKey(0)
    kx, kw, kb = jax.random.split(key, 3)

    # Deterministic init mimicking nn.Linear's uniform(-1/sqrt(in), 1/sqrt(in)).
    bound = 1.0 / (input_dim ** 0.5)
    weight = jax.random.uniform(kw, (output_dim, input_dim),
                                minval=-bound, maxval=bound, dtype=jnp.float32)
    bias = jax.random.uniform(kb, (output_dim,),
                              minval=-bound, maxval=bound, dtype=jnp.float32)
    x = jax.random.normal(kx, (batch, input_dim), dtype=jnp.float32)

    # Primary check at the module's shapes (single-block path).
    y = linear_pallas(x, weight, bias)
    jax.block_until_ready(y)
    y_ref = x @ weight.T + bias
    assert jnp.allclose(y, y_ref, atol=1e-5, rtol=1e-5), "small-path mismatch"

    # Secondary check exercising the tiled / pipelined path (still tiny work).
    kx2, kw2, kb2 = jax.random.split(jax.random.PRNGKey(0), 3)
    M, K, N = 256, 512, 256
    x_big = jax.random.normal(kx2, (M, K), dtype=jnp.float32)
    w_big = jax.random.normal(kw2, (N, K), dtype=jnp.float32) * 0.02
    b_big = jax.random.normal(kb2, (N,), dtype=jnp.float32) * 0.02
    y_big = linear_pallas(x_big, w_big, b_big)
    jax.block_until_ready(y_big)
    y_big_ref = x_big @ w_big.T + b_big
    # Loose tolerance: XLA's default f32 matmul on TPU may use reduced-precision
    # MXU passes, so reference and kernel can differ at the ~1e-3 level.
    assert jnp.allclose(y_big, y_big_ref, atol=1e-2, rtol=1e-2), "tiled-path mismatch"

    print("KERNEL_OK")
</pallas_src>

<mosaic_0001>
module attributes {stable_mosaic.version = 11 : i64} {
  func.func @_linear_single_block_kernel(%arg0: memref<8x8xf32, #tpu.memory_space<vmem>>, %arg1: memref<8x8xf32, #tpu.memory_space<vmem>>, %arg2: memref<1x8xf32, #tpu.memory_space<vmem>>, %arg3: memref<8x8xf32, #tpu.memory_space<vmem>>) attributes {dimension_semantics = [], scalar_prefetch = 0 : i64, scratch_operands = 0 : i64, tpu.core_type = #tpu.core_type<tc>} {
    %c0 = arith.constant 0 : index
    %c0_0 = arith.constant 0 : index
    %0 = vector.load %arg0[%c0, %c0_0] : memref<8x8xf32, #tpu.memory_space<vmem>>, vector<8x8xf32>
    %c0_1 = arith.constant 0 : index
    %c0_2 = arith.constant 0 : index
    %1 = vector.load %arg1[%c0_1, %c0_2] : memref<8x8xf32, #tpu.memory_space<vmem>>, vector<8x8xf32>
    %cst = arith.constant dense<0.000000e+00> : vector<8x8xf32>
    %2 = tpu.matmul %0, %1, %cst {dimension_numbers = #tpu.dot_dimension_numbers<[1], [1], [0], [0], [0, 0, 1, 0], [], []>} : vector<8x8xf32>, vector<8x8xf32>, vector<8x8xf32> -> vector<8x8xf32>
    %c0_3 = arith.constant 0 : index
    %c0_4 = arith.constant 0 : index
    %3 = vector.load %arg2[%c0_3, %c0_4] : memref<1x8xf32, #tpu.memory_space<vmem>>, vector<1x8xf32>
    %4 = vector.broadcast %3 : vector<1x8xf32> to vector<8x8xf32>
    %5 = arith.addf %2, %4 : vector<8x8xf32>
    %c0_5 = arith.constant 0 : index
    %c0_6 = arith.constant 0 : index
    %6 = vector.load %arg3[%c0_5, %c0_6] : memref<8x8xf32, #tpu.memory_space<vmem>>, vector<8x8xf32>
    tpu.vector_store %arg3[%c0_5, %c0_6], %5 {strides = array<i32>} : memref<8x8xf32, #tpu.memory_space<vmem>>, vector<8x8xf32>,
    return
  }
}

</mosaic_0001>

<llo_original>
// kernel: tpu_custom_call.1
$region0: #{tpu_custom_call.1}
  #allocation0 [shape = 'u32[]', space=smem, size = 0x4, offset = 0x4, fixed_abs, tag = 'smem constant byte address 0x4 - core index']
  #allocation1 [shape = 'u32[72,128]{1,0:T(1,128)}', space=vmem, size = 0x9000, scoped, tag = 'internal scratch']
  %s0 = inlined_call_operand.hbm [shape: f32[8,8], index: 0, kind: input, shape index: {}]
  %s1 = inlined_call_operand.hbm [shape: f32[8,8], index: 1, kind: input, shape index: {}]
  %s2 = inlined_call_operand.vmem [shape: f32[1,8], index: 2, kind: input, shape index: {}]
  %s3 = inlined_call_operand.hbm [shape: f32[8,8], index: 3, kind: output, shape index: {}]
  %s4 = sld [smem:[#allocation0]]
  $region30: #{tpu_custom_call.1} parent=0
    _
  %s6 = ssub.s32 1, %s4
  %s7 = scalar_select 0, %s6, %s4
  $region1: #{tpu_custom_call.1} parent=0
    #allocation2 [shape = 'u8[4096]{0}', space=vmem, size = 0x1000, scoped, tag = 'input window, operand 0, single buffered']
    #allocation3 [shape = 's32[1]{0}', space=sflag, size = 0x4, scoped, tag = 'scoped memory for tpu_custom_call.1']
    #allocation4 [shape = 's32[1]{0}', space=sflag, size = 0x4, scoped, tag = 'scoped memory for tpu_custom_call.1']
    #allocation5 [shape = 'u8[4096]{0}', space=vmem, size = 0x1000, scoped, tag = 'input window, operand 1, single buffered']
    #allocation6 [shape = 's32[1]{0}', space=sflag, size = 0x4, scoped, tag = 'scoped memory for tpu_custom_call.1']
    #allocation7 [shape = 'u8[4096]{0}', space=vmem, size = 0x1000, scoped, tag = 'output window, operand 0, single buffered']
    %8 = vsyncpa [#allocation3], 0
    %9 = vsyncpa [#allocation6], 0
    %10 = vsyncpa [#allocation4], 0
    // Predicated region
    $region2: #{tpu_custom_call.1} parent=1 // pred_check
      _
    $region3: #{tpu_custom_call.1} parent=1 // pred_check_branch
      %12 = sbr.rel (0) target = $region5
    $region4: #{tpu_custom_call.1} parent=1 // pred_region
      %14 = vsyncadd [#allocation3], 0
      %s16 = sshll.u32 %s0, 4
      %s17 = int_to_ptr.hbm [resolvable:$true] %s16
      %s18 = sshll.u32 [#allocation2], 4
      %s19 = int_to_ptr.vmem [resolvable:$true] %s18
      %21 = dma.hbm_to_vmem [thread:$0]  %s17, 128, %s19, [#allocation3]
    $region5: #{tpu_custom_call.1} parent=1 // pred_fallthru
      _
    // Predicated region
    $region6: #{tpu_custom_call.1} parent=1 // pred_check
      _
    $region7: #{tpu_custom_call.1} parent=1 // pred_check_branch
      %23 = sbr.rel (0) target = $region9
    $region8: #{tpu_custom_call.1} parent=1 // pred_region
      %25 = vsyncadd [#allocation6], 0
      %s27 = sshll.u32 %s1, 4
      %s28 = int_to_ptr.hbm [resolvable:$true] %s27
      %s29 = sshll.u32 [#allocation5], 4
      %s30 = int_to_ptr.vmem [resolvable:$true] %s29
      %32 = dma.hbm_to_vmem [thread:$0]  %s28, 128, %s30, [#allocation6]
    $region9: #{tpu_custom_call.1} parent=1 // pred_fallthru
      _
    // Predicated region
    $region10: #{tpu_custom_call.1} parent=1 // pred_check
      _
    $region11: #{tpu_custom_call.1} parent=1 // pred_check_branch
      %34 = sbr.rel (0) target = $region13
    $region12: #{tpu_custom_call.1} parent=1 // pred_region
      _
    $region13: #{tpu_custom_call.1} parent=1 // pred_fallthru
      _
    // Predicated region
    $region14: #{tpu_custom_call.1} parent=1 // pred_check
      _
    $region15: #{tpu_custom_call.1} parent=1 // pred_check_branch
      %36 = sbr.rel (0) target = $region17
    $region16: #{tpu_custom_call.1} parent=1 // pred_region
      %38 = dma.done [#allocation3], 128
    $region17: #{tpu_custom_call.1} parent=1 // pred_fallthru
      _
    // Predicated region
    $region18: #{tpu_custom_call.1} parent=1 // pred_check
      _
    $region19: #{tpu_custom_call.1} parent=1 // pred_check_branch
      %40 = sbr.rel (0) target = $region21
    $region20: #{tpu_custom_call.1} parent=1 // pred_region
      %42 = dma.done [#allocation6], 128
    $region21: #{tpu_custom_call.1} parent=1 // pred_fallthru
      _
    %v43 = vld [vmem:[#allocation2] sm:$0xff]
    %v44 = vld [vmem:[#allocation5] sm:$0xff]
    %v45 = vld [vmem:[%s2] sm:$0x1]
    %v47 = vperm.slane %v45, 0
    %vm49 = vcmask 64512
    %v51 = vsel %vm49, %v43, 0
    %v54 = vsel %vm49, %v44, 0
    %56 = vmatpush.xpose.msra.mxu0 0.0
    %57 = vmatpush.xpose.msra.mxu0 0.0
    %58 = vmatpush.xpose.msra.mxu0 0.0
    %59 = vmatpush.xpose.msra.mxu0 0.0
    %60 = vmatpush.xpose.msra.mxu0 0.0
    %61 = vmatpush.xpose.msra.mxu0 0.0
    %62 = vmatpush.xpose.msra.mxu0 0.0
    %63 = vmatpush.xpose.msra.mxu0 0.0
    %64 = vmatpush.xpose.msra.mxu0 0.0
    %65 = vmatpush.xpose.msra.mxu0 0.0
    %66 = vmatpush.xpose.msra.mxu0 0.0
    %67 = vmatpush.xpose.msra.mxu0 0.0
    %68 = vmatpush.xpose.msra.mxu0 0.0
    %69 = vmatpush.xpose.msra.mxu0 0.0
    %70 = vmatpush.xpose.msra.mxu0 0.0
    %71 = vmatpush.xpose.msra.mxu0 %v54
    %72 = vmatmul.f32.gmra.mxu0 %v51
    %v73 = vpop.f32.mrf.mxu0
    %v74 = vadd.f32 %v47, %v73
    %75 = vdwg.mxu0
    %76 = vst.msk [vmem:[#allocation7] sm:$0xff] %vm49, %v74
    // Predicated region
    $region22: #{tpu_custom_call.1} parent=1 // pred_check
      _
    $region23: #{tpu_custom_call.1} parent=1 // pred_check_branch
      %78 = sbr.rel (0) target = $region25
    $region24: #{tpu_custom_call.1} parent=1 // pred_region
      %80 = vsyncadd [#allocation4], 0
      %s82 = sshll.u32 [#allocation7], 4
      %s83 = int_to_ptr.vmem [resolvable:$true] %s82
      %s84 = sshll.u32 %s3, 4
      %s85 = int_to_ptr.hbm [resolvable:$true] %s84
      %87 = dma.vmem_to_hbm [thread:$0]  %s83, 128, %s85, [#allocation4]
    $region25: #{tpu_custom_call.1} parent=1 // pred_fallthru
      _
    // Predicated region
    $region26: #{tpu_custom_call.1} parent=1 // pred_check
      _
    $region27: #{tpu_custom_call.1} parent=1 // pred_check_branch
      %89 = sbr.rel (0) target = $region29
    $region28: #{tpu_custom_call.1} parent=1 // pred_region
      %91 = dma.done [#allocation4], 128
    $region29: #{tpu_custom_call.1} parent=1 // pred_fallthru
      _
    %92 = vsyncpa [#allocation3], 1
    %93 = vsyncpa [#allocation6], 1
    %94 = vsyncpa [#allocation4], 1

</llo_original>
